<compile_context>
chip_gen: v5e
topology: v5e:2x2
jax: 0.10.0
libtpu: 0.0.40
codegen_flags: <defaults>
</compile_context>

<pallas_src>
import functools

import jax
import jax.numpy as jnp
from jax.experimental import pallas as pl
from jax.experimental.pallas import tpu as pltpu

EPS = 1e-5
LANE = 128


def _bn_kernel(x_ref, w_ref, b_ref, o_ref, *, inv_count):
    # x_ref: (N, c_tile, Lp) f32, zero-padded beyond the true H*W extent.
    # w_ref / b_ref: (c_tile, 1) f32.
    x = x_ref[...]

    # One-pass per-channel batch statistics over (N, H*W).  Padded lanes are
    # zero, so they do not perturb either sum; divide by the true count.
    s = jnp.sum(x, axis=(0, 2), keepdims=True)           # (1, c_tile, 1)
    ss = jnp.sum(x * x, axis=(0, 2), keepdims=True)      # (1, c_tile, 1)
    mean = s * inv_count
    var = jnp.maximum(ss * inv_count - mean * mean, 0.0)  # clamp cancellation
    inv_std = jax.lax.rsqrt(var + EPS)

    # Fold the affine into a single scale/shift: the L-wide pass is mul + add.
    scale = inv_std * w_ref[...]                          # (1, c_tile, 1)
    shift = b_ref[...] - mean * scale                     # (1, c_tile, 1)
    o_ref[...] = x * scale + shift


def _pick_c_tile(C):
    for t in (168, 256, 192, 128, 64, 32, 16, 8):
        if C % t == 0:
            return t
    return C


def batchnorm2d_pallas(x_nchw, weight, bias):
    """BatchNorm2d forward using batch statistics. x_nchw: (N, C, H, W) f32."""
    N, C, H, W = x_nchw.shape
    HW = H * W
    L = N * HW  # true per-channel element count

    # (N, C, H, W) -> (N, C, H*W): contiguous reshape, no transpose needed.
    x3 = x_nchw.reshape(N, C, HW).astype(jnp.float32)

    # Pad the lane axis up to a multiple of 128 with zeros (lane-dense tiles).
    Lp = pl.cdiv(HW, LANE) * LANE
    if Lp != HW:
        x3 = jnp.pad(x3, ((0, 0), (0, 0), (0, Lp - HW)))

    w = weight.reshape(C, 1).astype(jnp.float32)
    b = bias.reshape(C, 1).astype(jnp.float32)

    c_tile = _pick_c_tile(C)
    assert C % c_tile == 0 and (c_tile % 8 == 0 or c_tile == C)
    grid = (C // c_tile,)

    kernel = functools.partial(_bn_kernel, inv_count=1.0 / float(L))

    out = pl.pallas_call(
        kernel,
        out_shape=jax.ShapeDtypeStruct((N, C, Lp), jnp.float32),
        grid=grid,
        in_specs=[
            pl.BlockSpec((N, c_tile, Lp), lambda i: (0, i, 0)),
            pl.BlockSpec((c_tile, 1), lambda i: (i, 0)),
            pl.BlockSpec((c_tile, 1), lambda i: (i, 0)),
        ],
        out_specs=pl.BlockSpec((N, c_tile, Lp), lambda i: (0, i, 0)),
        compiler_params=pltpu.CompilerParams(
            dimension_semantics=("parallel",),
        ),
    )(x3, w, b)

    # Drop the lane padding and restore NCHW.
    return out[:, :, :HW].reshape(N, C, H, W)


def batchnorm2d_ref(x, weight, bias):
    mean = jnp.mean(x, axis=(0, 2, 3), keepdims=True)
    var = jnp.mean((x - mean) ** 2, axis=(0, 2, 3), keepdims=True)
    w = weight.reshape(1, -1, 1, 1)
    b = bias.reshape(1, -1, 1, 1)
    return (x - mean) * jax.lax.rsqrt(var + EPS) * w + b


if __name__ == "__main__":
    key = jax.random.PRNGKey(0)
    kx, kw, kb = jax.random.split(key, 3)

    N, C, H, W = 1, 1344, 14, 14  # shape implied by BatchNorm2d(1344) + x173
    x = jax.random.normal(kx, (N, C, H, W), dtype=jnp.float32)

    # Deterministic affine parameters (perturbed from the PyTorch defaults so
    # the scale/shift path is actually exercised).
    weight = 1.0 + 0.1 * jax.random.normal(kw, (C,), dtype=jnp.float32)
    bias = 0.1 * jax.random.normal(kb, (C,), dtype=jnp.float32)

    out = batchnorm2d_pallas(x, weight, bias)
    out = jax.block_until_ready(out)

    ref = batchnorm2d_ref(x, weight, bias)
    assert out.shape == (N, C, H, W)
    assert jnp.allclose(out, ref, atol=1e-4, rtol=1e-4)

    print("KERNEL_OK")
</pallas_src>

<mosaic_0001>
module attributes {stable_mosaic.version = 11 : i64} {
  func.func @_bn_kernel(%arg0: i32, %arg1: memref<1x168x256xf32, #tpu.memory_space<vmem>>, %arg2: memref<168x1xf32, #tpu.memory_space<vmem>>, %arg3: memref<168x1xf32, #tpu.memory_space<vmem>>, %arg4: memref<1x168x256xf32, #tpu.memory_space<vmem>>) attributes {dimension_semantics = [#tpu.dimension_semantics<parallel>], iteration_bounds = array<i64: 8>, scalar_prefetch = 0 : i64, scratch_operands = 0 : i64, tpu.core_type = #tpu.core_type<tc>, window_params = [{transform_indices = @transform_0, window_bounds = array<i64: 1, 168, 256>}, {transform_indices = @transform_1, window_bounds = array<i64: 168, 1>}, {transform_indices = @transform_2, window_bounds = array<i64: 168, 1>}, {transform_indices = @transform_3, window_bounds = array<i64: 1, 168, 256>}]} {
    %c0 = arith.constant 0 : index
    %c0_0 = arith.constant 0 : index
    %c0_1 = arith.constant 0 : index
    %0 = vector.load %arg1[%c0, %c0_0, %c0_1] : memref<1x168x256xf32, #tpu.memory_space<vmem>>, vector<1x168x256xf32>
    %cst = arith.constant dense<0.000000e+00> : vector<168xf32>
    %1 = vector.multi_reduction <add>, %0, %cst [0, 2] : vector<1x168x256xf32> to vector<168xf32>
    %2 = vector.shape_cast %1 : vector<168xf32> to vector<1x168x1xf32>
    %3 = arith.mulf %0, %0 : vector<1x168x256xf32>
    %cst_2 = arith.constant dense<0.000000e+00> : vector<168xf32>
    %4 = vector.multi_reduction <add>, %3, %cst_2 [0, 2] : vector<1x168x256xf32> to vector<168xf32>
    %5 = vector.shape_cast %4 : vector<168xf32> to vector<1x168x1xf32>
    %cst_3 = arith.constant 0.00510204071 : f32
    %6 = vector.broadcast %cst_3 : f32 to vector<1x168x1xf32>
    %7 = arith.mulf %2, %6 : vector<1x168x1xf32>
    %cst_4 = arith.constant 0.00510204071 : f32
    %8 = vector.broadcast %cst_4 : f32 to vector<1x168x1xf32>
    %9 = arith.mulf %5, %8 : vector<1x168x1xf32>
    %10 = arith.mulf %7, %7 : vector<1x168x1xf32>
    %11 = arith.subf %9, %10 : vector<1x168x1xf32>
    %cst_5 = arith.constant 0.000000e+00 : f32
    %12 = vector.broadcast %cst_5 : f32 to vector<1x168x1xf32>
    %13 = arith.maximumf %11, %12 : vector<1x168x1xf32>
    %cst_6 = arith.constant 9.99999974E-6 : f32
    %14 = vector.broadcast %cst_6 : f32 to vector<1x168x1xf32>
    %15 = arith.addf %13, %14 : vector<1x168x1xf32>
    %16 = math.rsqrt %15 : vector<1x168x1xf32>
    %c0_7 = arith.constant 0 : index
    %c0_8 = arith.constant 0 : index
    %17 = vector.load %arg2[%c0_7, %c0_8] : memref<168x1xf32, #tpu.memory_space<vmem>>, vector<168x1xf32>
    %18 = vector.shape_cast %17 : vector<168x1xf32> to vector<1x168x1xf32>
    %19 = arith.mulf %16, %18 : vector<1x168x1xf32>
    %c0_9 = arith.constant 0 : index
    %c0_10 = arith.constant 0 : index
    %20 = vector.load %arg3[%c0_9, %c0_10] : memref<168x1xf32, #tpu.memory_space<vmem>>, vector<168x1xf32>
    %21 = arith.mulf %7, %19 : vector<1x168x1xf32>
    %22 = vector.shape_cast %20 : vector<168x1xf32> to vector<1x168x1xf32>
    %23 = arith.subf %22, %21 : vector<1x168x1xf32>
    %24 = vector.broadcast %19 : vector<1x168x1xf32> to vector<1x168x256xf32>
    %25 = arith.mulf %0, %24 : vector<1x168x256xf32>
    %26 = vector.broadcast %23 : vector<1x168x1xf32> to vector<1x168x256xf32>
    %27 = arith.addf %25, %26 : vector<1x168x256xf32>
    %c0_11 = arith.constant 0 : index
    %c0_12 = arith.constant 0 : index
    %c0_13 = arith.constant 0 : index
    %28 = vector.load %arg4[%c0_11, %c0_12, %c0_13] : memref<1x168x256xf32, #tpu.memory_space<vmem>>, vector<1x168x256xf32>
    tpu.vector_store %arg4[%c0_11, %c0_12, %c0_13], %27 {strides = array<i32>} : memref<1x168x256xf32, #tpu.memory_space<vmem>>, vector<1x168x256xf32>,
    return
  }
  func.func @transform_0(%arg0: i32) -> (i32, i32, i32) {
    %c0_i32 = arith.constant 0 : i32
    %c0_i32_0 = arith.constant 0 : i32
    %c0_i32_1 = arith.constant 0 : i32
    return %c0_i32, %arg0, %c0_i32_0 : i32, i32, i32
  }
  func.func @transform_1(%arg0: i32) -> (i32, i32) {
    %c0_i32 = arith.constant 0 : i32
    %c0_i32_0 = arith.constant 0 : i32
    return %arg0, %c0_i32 : i32, i32
  }
  func.func @transform_2(%arg0: i32) -> (i32, i32) {
    %c0_i32 = arith.constant 0 : i32
    %c0_i32_0 = arith.constant 0 : i32
    return %arg0, %c0_i32 : i32, i32
  }
  func.func @transform_3(%arg0: i32) -> (i32, i32, i32) {
    %c0_i32 = arith.constant 0 : i32
    %c0_i32_0 = arith.constant 0 : i32
    %c0_i32_1 = arith.constant 0 : i32
    return %c0_i32, %arg0, %c0_i32_0 : i32, i32, i32
  }
}

</mosaic_0001>

<llo_original>
// kernel: tpu_custom_call.1
$region0: #{tpu_custom_call.1}
  #allocation0 [shape = 'u32[]', space=smem, size = 0x4, offset = 0x4, fixed_abs, tag = 'smem constant byte address 0x4 - core index']
  #allocation1 [shape = 'u32[72,128]{1,0:T(1,128)}', space=vmem, size = 0x9000, scoped, tag = 'internal scratch']
  %s0 = inlined_call_operand.vmem [shape: f32[1,1344,256], index: 0, kind: input, shape index: {}]
  %s1 = inlined_call_operand.vmem [shape: f32[1344,1], index: 1, kind: input, shape index: {}]
  %s2 = inlined_call_operand.vmem [shape: f32[1344,1], index: 2, kind: input, shape index: {}]
  %s3 = inlined_call_operand.hbm [shape: f32[1,1344,256], index: 3, kind: output, shape index: {}]
  %s4 = sld [smem:[#allocation0]]
  $region45: #{tpu_custom_call.1} parent=0
    _
  %s6 = ssub.s32 1, %s4
  %s7 = scalar_select 0, %s6, %s4
  $region1: #{tpu_custom_call.1} parent=0
    #allocation2 [shape = 'u8[344064]{0}', space=vmem, size = 0x54000, scoped, tag = 'output window, operand 0']
    #allocation3 [shape = 's32[2]{0}', space=sflag, size = 0x8, scoped, tag = 'scoped memory for tpu_custom_call.1']
    %8 = vsyncpa [#allocation3], 0
    %s9 = scalar_lea.sflag [#allocation3], 1
    %10 = vsyncpa %s9, 0
    loop: start=0, step=1, limit=10
    $region2: #{tpu_custom_call.1} parent=1 // loop_pre_header
      _
    $region3: #{tpu_custom_call.1} parent=1 // loop_header
      %s12 = sphi 0, %s16
      %p13 = scmp.ge.s32.totalorder %s12, 10
      %s22 = sphi 0, %s24
      %s25 = sphi 0, %s22
      %s26 = sphi 0, %s25
      %s42 = sphi 0, %s26
      %s48 = sphi 0, %s50
      %s51 = sphi 0, %s48
      %s52 = sphi 0, %s51
      %s68 = sphi 0, %s52
      %s74 = sphi 0, %s76
      %s77 = sphi 0, %s74
      %s78 = sphi 0, %s77
      %s94 = sphi 0, %s78
      %s100 = sphi 0, %s102
      %s103 = sphi 0, %s100
      %s104 = sphi 0, %s103
      %s120 = sphi 0, %s104
    $region4: #{tpu_custom_call.1} parent=1 // loop_header_branch
      %15 = sbr.rel (%p13) target = $region8
    $region5: #{tpu_custom_call.1} parent=1 // loop_body
      %s17 = ssub.s32 %s12, 1
      %s18 = ssub.s32 %s12, 2
      %s19 = sadd.s32 %s12, 1
      %s20 = ssub.s32 %s12, %s19
      %p21 = scmp.eq.s32.totalorder %s20, 0
      %s23 = sadd.s32 %s22, 1
      %s24 = scalar_select %p21, %s22, %s23
      %p27 = pneg %p21
      %p28 = scmp.eq.s32.totalorder %s12, 7
      %p29 = por %p27, %p28
      %p30 = scmp.ne.s32.totalorder %s22, %s25
      %p31 = scmp.eq.s32.totalorder %s12, 0
      %p32 = por %p30, %p31
      %p33 = scmp.ne.s32.totalorder %s22, %s25
      %p34 = scmp.eq.s32.totalorder %s17, 7
      %p35 = por %p33, %p34
      %p36 = scmp.ne.s32.totalorder %s25, %s26
      %p37 = scmp.eq.s32.totalorder %s17, 0
      %p38 = por %p36, %p37
      %p39 = scmp.ne.s32.totalorder %s25, %s26
      %p40 = scmp.eq.s32.totalorder %s18, 7
      %p41 = por %p39, %p40
      %p43 = scmp.ne.s32.totalorder %s26, %s42
      %p44 = scmp.eq.s32.totalorder %s18, 0
      %p45 = por %p43, %p44
      %s46 = ssub.s32 %s12, %s19
      %p47 = scmp.eq.s32.totalorder %s46, 0
      %s49 = sadd.s32 %s48, 1
      %s50 = scalar_select %p47, %s48, %s49
      %p53 = pneg %p47
      %p54 = scmp.eq.s32.totalorder %s12, 7
      %p55 = por %p53, %p54
      %p56 = scmp.ne.s32.totalorder %s48, %s51
      %p57 = scmp.eq.s32.totalorder %s12, 0
      %p58 = por %p56, %p57
      %p59 = scmp.ne.s32.totalorder %s48, %s51
      %p60 = scmp.eq.s32.totalorder %s17, 7
      %p61 = por %p59, %p60
      %p62 = scmp.ne.s32.totalorder %s51, %s52
      %p63 = scmp.eq.s32.totalorder %s17, 0
      %p64 = por %p62, %p63
      %p65 = scmp.ne.s32.totalorder %s51, %s52
      %p66 = scmp.eq.s32.totalorder %s18, 7
      %p67 = por %p65, %p66
      %p69 = scmp.ne.s32.totalorder %s52, %s68
      %p70 = scmp.eq.s32.totalorder %s18, 0
      %p71 = por %p69, %p70
      %s72 = ssub.s32 %s12, %s19
      %p73 = scmp.eq.s32.totalorder %s72, 0
      %s75 = sadd.s32 %s74, 1
      %s76 = scalar_select %p73, %s74, %s75
      %p79 = pneg %p73
      %p80 = scmp.eq.s32.totalorder %s12, 7
      %p81 = por %p79, %p80
      %p82 = scmp.ne.s32.totalorder %s74, %s77
      %p83 = scmp.eq.s32.totalorder %s12, 0
      %p84 = por %p82, %p83
      %p85 = scmp.ne.s32.totalorder %s74, %s77
      %p86 = scmp.eq.s32.totalorder %s17, 7
      %p87 = por %p85, %p86
      %p88 = scmp.ne.s32.totalorder %s77, %s78
      %p89 = scmp.eq.s32.totalorder %s17, 0
      %p90 = por %p88, %p89
      %p91 = scmp.ne.s32.totalorder %s77, %s78
      %p92 = scmp.eq.s32.totalorder %s18, 7
      %p93 = por %p91, %p92
      %p95 = scmp.ne.s32.totalorder %s78, %s94
      %p96 = scmp.eq.s32.totalorder %s18, 0
      %p97 = por %p95, %p96
      %s98 = ssub.s32 %s12, %s19
      %p99 = scmp.eq.s32.totalorder %s98, 0
      %s101 = sadd.s32 %s100, 1
      %s102 = scalar_select %p99, %s100, %s101
      %p105 = pneg %p99
      %p106 = scmp.eq.s32.totalorder %s12, 7
      %p107 = por %p105, %p106
      %p108 = scmp.ne.s32.totalorder %s100, %s103
      %p109 = scmp.eq.s32.totalorder %s12, 0
      %p110 = por %p108, %p109
      %p111 = scmp.ne.s32.totalorder %s100, %s103
      %p112 = scmp.eq.s32.totalorder %s17, 7
      %p113 = por %p111, %p112
      %p114 = scmp.ne.s32.totalorder %s103, %s104
      %p115 = scmp.eq.s32.totalorder %s17, 0
      %p116 = por %p114, %p115
      %p117 = scmp.ne.s32.totalorder %s103, %s104
      %p118 = scmp.eq.s32.totalorder %s18, 7
      %p119 = por %p117, %p118
      %p121 = scmp.ne.s32.totalorder %s104, %s120
      %p122 = scmp.eq.s32.totalorder %s18, 0
      %p123 = por %p121, %p122
      %p124 = scmp.le.s32.totalorder 1, %s12
      %p125 = scmp.lt.s32.totalorder %s12, 9
      %p126 = pnand %p124, %p125
      %p127 = pneg %p126
      // Predicated region
      $region9: #{tpu_custom_call.1} parent=5 // pred_check
        _
      $region10: #{tpu_custom_call.1} parent=5 // pred_check_branch
        %129 = sbr.rel (%p126) target = $region12
      $region11: #{tpu_custom_call.1} parent=5 // pred_region
        %s130 = ssub.s32 %s12, 1
      $region12: #{tpu_custom_call.1} parent=5 // pred_fallthru
        _
      %p131 = scmp.lt.s32.totalorder %s12, 8
      // Predicated region
      $region13: #{tpu_custom_call.1} parent=5 // pred_check
        %p132 = pneg %p131
      $region14: #{tpu_custom_call.1} parent=5 // pred_check_branch
        %134 = sbr.rel (%p132) target = $region16
      $region15: #{tpu_custom_call.1} parent=5 // pred_region
        // Predicated region
        $region17: #{tpu_custom_call.1} parent=15 // pred_check
          %p135 = pneg %p32
        $region18: #{tpu_custom_call.1} parent=15 // pred_check_branch
          %137 = sbr.rel (%p135) target = $region20
        $region19: #{tpu_custom_call.1} parent=15 // pred_region
          %s138 = smul.u32 21, %s12
          %p139 = scmp.lt.s32.totalorder %s138, 167
          %s140 = scalar_select %p139, %s138, 167
          %s141 = smul.addr %s140, 2
          %s142 = smul.addr %s141, 8
          %s143 = scalar_lea.vmem %s0, %s142
          %s144 = smul.u32 21, %s12
        $region20: #{tpu_custom_call.1} parent=15 // pred_fallthru
          _
        // Predicated region
        $region21: #{tpu_custom_call.1} parent=15 // pred_check
          %p145 = pneg %p58
        $region22: #{tpu_custom_call.1} parent=15 // pred_check_branch
          %147 = sbr.rel (%p145) target = $region24
        $region23: #{tpu_custom_call.1} parent=15 // pred_region
          %s148 = smul.u32 21, %s12
          %p149 = scmp.lt.s32.totalorder %s148, 167
          %s150 = scalar_select %p149, %s148, 167
          %s151 = smul.addr %s150, 8
          %s152 = scalar_lea.vmem %s1, %s151
          %s153 = smul.u32 21, %s12
        $region24: #{tpu_custom_call.1} parent=15 // pred_fallthru
          _
        // Predicated region
        $region25: #{tpu_custom_call.1} parent=15 // pred_check
          %p154 = pneg %p84
        $region26: #{tpu_custom_call.1} parent=15 // pred_check_branch
          %156 = sbr.rel (%p154) target = $region28
        $region27: #{tpu_custom_call.1} parent=15 // pred_region
          %s157 = smul.u32 21, %s12
          %p158 = scmp.lt.s32.totalorder %s157, 167
          %s159 = scalar_select %p158, %s157, 167
          %s160 = smul.addr %s159, 8
          %s161 = scalar_lea.vmem %s2, %s160
          %s162 = smul.u32 21, %s12
        $region28: #{tpu_custom_call.1} parent=15 // pred_fallthru
          _
      $region16: #{tpu_custom_call.1} parent=5 // pred_fallthru
        _
      %p163 = scmp.le.s32.totalorder 1, %s12
      %p164 = scmp.lt.s32.totalorder %s12, 9
      %p165 = pnand %p163, %p164
      %p166 = pneg %p165
      // Predicated region
      $region29: #{tpu_custom_call.1} parent=5 // pred_check
        _
      $region30: #{tpu_custom_call.1} parent=5 // pred_check_branch
        %168 = sbr.rel (%p165) target = $region32
      $region31: #{tpu_custom_call.1} parent=5 // pred_region
        %s169 = ssub.s32 %s12, 1
        %s170 = smul.u32 21, %s17
        %p171 = scmp.lt.s32.totalorder %s170, 167
        %s172 = scalar_select %p171, %s170, 167
        %s173 = smul.addr %s172, 2
        %s174 = smul.addr %s173, 8
        %s175 = scalar_lea.vmem %s0, %s174
        %p176 = pneg %p38
        %p177 = pneg %p35
        %s178 = smul.u32 21, %s17
        %p179 = scmp.lt.s32.totalorder %s178, 167
        %s180 = scalar_select %p179, %s178, 167
        %s181 = smul.addr %s180, 8
        %s182 = scalar_lea.vmem %s1, %s181
        %p183 = pneg %p64
        %p184 = pneg %p61
        %s185 = smul.u32 21, %s17
        %p186 = scmp.lt.s32.totalorder %s185, 167
        %s187 = scalar_select %p186, %s185, 167
        %s188 = smul.addr %s187, 8
        %s189 = scalar_lea.vmem %s2, %s188
        %p190 = pneg %p90
        %p191 = pneg %p87
        %p192 = pneg %p116
        %p193 = pneg %p113
        %s194 = sand.u32 %s103, 1
        %s195 = scalar_lea.sflag [#allocation3], %s194
        %s196 = sand.u32 %s103, 1
        %s197 = smul.addr %s196, 336
        %s198 = scalar_lea.vmem [#allocation2], %s197
        %s199 = smul.u32 21, %s17
        %p200 = scmp.lt.s32.totalorder %s199, 167
        %s201 = scalar_select %p200, %s199, 167
        %s202 = smul.addr %s201, 2
        %s203 = smul.addr %s202, 8
        %s204 = scalar_lea.vmem %s0, %s203
        %s205 = smul.u32 21, %s17
        %s206 = smul.u32 21, %s17
        %p207 = scmp.lt.s32.totalorder %s206, 167
        %s208 = scalar_select %p207, %s206, 167
        %s209 = smul.addr %s208, 8
        %s210 = scalar_lea.vmem %s1, %s209
        %s211 = smul.u32 21, %s17
        %s212 = smul.u32 21, %s17
        %p213 = scmp.lt.s32.totalorder %s212, 167
        %s214 = scalar_select %p213, %s212, 167
        %s215 = smul.addr %s214, 8
        %s216 = scalar_lea.vmem %s2, %s215
        %s217 = smul.u32 21, %s17
        %s218 = smul.u32 21, %s17
        %v219 = vld [vmem:[%s204] sm:$0xff]
        %v220 = vld [vmem:[%s204 + $0x8] sm:$0xff]
        %v221 = vld [vmem:[%s204 + $0x10] sm:$0xff]
        %v222 = vld [vmem:[%s204 + $0x18] sm:$0xff]
        %v223 = vld [vmem:[%s204 + $0x20] sm:$0xff]
        %v224 = vld [vmem:[%s204 + $0x28] sm:$0xff]
        %v225 = vld [vmem:[%s204 + $0x30] sm:$0xff]
        %v226 = vld [vmem:[%s204 + $0x38] sm:$0xff]
        %v227 = vld [vmem:[%s204 + $0x40] sm:$0xff]
        %v228 = vld [vmem:[%s204 + $0x48] sm:$0xff]
        %v229 = vld [vmem:[%s204 + $0x50] sm:$0xff]
        %v230 = vld [vmem:[%s204 + $0x58] sm:$0xff]
        %v231 = vld [vmem:[%s204 + $0x60] sm:$0xff]
        %v232 = vld [vmem:[%s204 + $0x68] sm:$0xff]
        %v233 = vld [vmem:[%s204 + $0x70] sm:$0xff]
        %v234 = vld [vmem:[%s204 + $0x78] sm:$0xff]
        %v235 = vld [vmem:[%s204 + $0x80] sm:$0xff]
        %v236 = vld [vmem:[%s204 + $0x88] sm:$0xff]
        %v237 = vld [vmem:[%s204 + $0x90] sm:$0xff]
        %v238 = vld [vmem:[%s204 + $0x98] sm:$0xff]
        %v239 = vld [vmem:[%s204 + $0xa0] sm:$0xff]
        %v240 = vld [vmem:[%s204 + $0xa8] sm:$0xff]
        %v241 = vld [vmem:[%s204 + $0xb0] sm:$0xff]
        %v242 = vld [vmem:[%s204 + $0xb8] sm:$0xff]
        %v243 = vld [vmem:[%s204 + $0xc0] sm:$0xff]
        %v244 = vld [vmem:[%s204 + $0xc8] sm:$0xff]
        %v245 = vld [vmem:[%s204 + $0xd0] sm:$0xff]
        %v246 = vld [vmem:[%s204 + $0xd8] sm:$0xff]
        %v247 = vld [vmem:[%s204 + $0xe0] sm:$0xff]
        %v248 = vld [vmem:[%s204 + $0xe8] sm:$0xff]
        %v249 = vld [vmem:[%s204 + $0xf0] sm:$0xff]
        %v250 = vld [vmem:[%s204 + $0xf8] sm:$0xff]
        %v251 = vld [vmem:[%s204 + $0x100] sm:$0xff]
        %v252 = vld [vmem:[%s204 + $0x108] sm:$0xff]
        %v253 = vld [vmem:[%s204 + $0x110] sm:$0xff]
        %v254 = vld [vmem:[%s204 + $0x118] sm:$0xff]
        %v255 = vld [vmem:[%s204 + $0x120] sm:$0xff]
        %v256 = vld [vmem:[%s204 + $0x128] sm:$0xff]
        %v257 = vld [vmem:[%s204 + $0x130] sm:$0xff]
        %v258 = vld [vmem:[%s204 + $0x138] sm:$0xff]
        %v259 = vld [vmem:[%s204 + $0x140] sm:$0xff]
        %v260 = vld [vmem:[%s204 + $0x148] sm:$0xff]
        %v261 = vadd.f32 %v219, %v220
        %262 = vadd.xlane.f32.xlu0 %v261
        %v263 = vpop.xlane.xlu0 %262
        %v264 = vadd.f32 %v221, %v222
        %265 = vadd.xlane.f32.xlu0 %v264
        %v266 = vpop.xlane.xlu0 %265
        %v267 = vadd.f32 %v223, %v224
        %268 = vadd.xlane.f32.xlu0 %v267
        %v269 = vpop.xlane.xlu0 %268
        %v270 = vadd.f32 %v225, %v226
        %271 = vadd.xlane.f32.xlu0 %v270
        %v272 = vpop.xlane.xlu0 %271
        %v273 = vadd.f32 %v227, %v228
        %274 = vadd.xlane.f32.xlu0 %v273
        %v275 = vpop.xlane.xlu0 %274
        %v276 = vadd.f32 %v229, %v230
        %277 = vadd.xlane.f32.xlu0 %v276
        %v278 = vpop.xlane.xlu0 %277
        %v279 = vadd.f32 %v231, %v232
        %280 = vadd.xlane.f32.xlu0 %v279
        %v281 = vpop.xlane.xlu0 %280
        %v282 = vadd.f32 %v233, %v234
        %283 = vadd.xlane.f32.xlu0 %v282
        %v284 = vpop.xlane.xlu0 %283
        %v285 = vadd.f32 %v235, %v236
        %286 = vadd.xlane.f32.xlu0 %v285
        %v287 = vpop.xlane.xlu0 %286
        %v288 = vadd.f32 %v237, %v238
        %289 = vadd.xlane.f32.xlu0 %v288
        %v290 = vpop.xlane.xlu0 %289
        %v291 = vadd.f32 %v239, %v240
        %292 = vadd.xlane.f32.xlu0 %v291
        %v293 = vpop.xlane.xlu0 %292
        %v294 = vadd.f32 %v241, %v242
        %295 = vadd.xlane.f32.xlu0 %v294
        %v296 = vpop.xlane.xlu0 %295
        %v297 = vadd.f32 %v243, %v244
        %298 = vadd.xlane.f32.xlu0 %v297
        %v299 = vpop.xlane.xlu0 %298
        %v300 = vadd.f32 %v245, %v246
        %301 = vadd.xlane.f32.xlu0 %v300
        %v302 = vpop.xlane.xlu0 %301
        %v303 = vadd.f32 %v247, %v248
        %304 = vadd.xlane.f32.xlu0 %v303
        %v305 = vpop.xlane.xlu0 %304
        %v306 = vadd.f32 %v249, %v250
        %307 = vadd.xlane.f32.xlu0 %v306
        %v308 = vpop.xlane.xlu0 %307
        %v309 = vadd.f32 %v251, %v252
        %310 = vadd.xlane.f32.xlu0 %v309
        %v311 = vpop.xlane.xlu0 %310
        %v312 = vadd.f32 %v253, %v254
        %313 = vadd.xlane.f32.xlu0 %v312
        %v314 = vpop.xlane.xlu0 %313
        %v315 = vadd.f32 %v255, %v256
        %316 = vadd.xlane.f32.xlu0 %v315
        %v317 = vpop.xlane.xlu0 %316
        %v318 = vadd.f32 %v257, %v258
        %319 = vadd.xlane.f32.xlu0 %v318
        %v320 = vpop.xlane.xlu0 %319
        %v321 = vadd.f32 %v259, %v260
        %322 = vadd.xlane.f32.xlu0 %v321
        %v323 = vpop.xlane.xlu0 %322
        %v324 = vmul.f32 %v219, %v219
        %v325 = vmul.f32 %v220, %v220
        %v326 = vmul.f32 %v221, %v221
        %v327 = vmul.f32 %v222, %v222
        %v328 = vmul.f32 %v223, %v223
        %v329 = vmul.f32 %v224, %v224
        %v330 = vmul.f32 %v225, %v225
        %v331 = vmul.f32 %v226, %v226
        %v332 = vmul.f32 %v227, %v227
        %v333 = vmul.f32 %v228, %v228
        %v334 = vmul.f32 %v229, %v229
        %v335 = vmul.f32 %v230, %v230
        %v336 = vmul.f32 %v231, %v231
        %v337 = vmul.f32 %v232, %v232
        %v338 = vmul.f32 %v233, %v233
        %v339 = vmul.f32 %v234, %v234
        %v340 = vmul.f32 %v235, %v235
        %v341 = vmul.f32 %v236, %v236
        %v342 = vmul.f32 %v237, %v237
        %v343 = vmul.f32 %v238, %v238
        %v344 = vmul.f32 %v239, %v239
        %v345 = vmul.f32 %v240, %v240
        %v346 = vmul.f32 %v241, %v241
        %v347 = vmul.f32 %v242, %v242
        %v348 = vmul.f32 %v243, %v243
        %v349 = vmul.f32 %v244, %v244
        %v350 = vmul.f32 %v245, %v245
        %v351 = vmul.f32 %v246, %v246
        %v352 = vmul.f32 %v247, %v247
        %v353 = vmul.f32 %v248, %v248
        %v354 = vmul.f32 %v249, %v249
        %v355 = vmul.f32 %v250, %v250
        %v356 = vmul.f32 %v251, %v251
        %v357 = vmul.f32 %v252, %v252
        %v358 = vmul.f32 %v253, %v253
        %v359 = vmul.f32 %v254, %v254
        %v360 = vmul.f32 %v255, %v255
        %v361 = vmul.f32 %v256, %v256
        %v362 = vmul.f32 %v257, %v257
        %v363 = vmul.f32 %v258, %v258
        %v364 = vmul.f32 %v259, %v259
        %v365 = vmul.f32 %v260, %v260
        %v366 = vadd.f32 %v324, %v325
        %367 = vadd.xlane.f32.xlu0 %v366
        %v368 = vpop.xlane.xlu0 %367
        %v369 = vadd.f32 %v326, %v327
        %370 = vadd.xlane.f32.xlu0 %v369
        %v371 = vpop.xlane.xlu0 %370
        %v372 = vadd.f32 %v328, %v329
        %373 = vadd.xlane.f32.xlu0 %v372
        %v374 = vpop.xlane.xlu0 %373
        %v375 = vadd.f32 %v330, %v331
        %376 = vadd.xlane.f32.xlu0 %v375
        %v377 = vpop.xlane.xlu0 %376
        %v378 = vadd.f32 %v332, %v333
        %379 = vadd.xlane.f32.xlu0 %v378
        %v380 = vpop.xlane.xlu0 %379
        %v381 = vadd.f32 %v334, %v335
        %382 = vadd.xlane.f32.xlu0 %v381
        %v383 = vpop.xlane.xlu0 %382
        %v384 = vadd.f32 %v336, %v337
        %385 = vadd.xlane.f32.xlu0 %v384
        %v386 = vpop.xlane.xlu0 %385
        %v387 = vadd.f32 %v338, %v339
        %388 = vadd.xlane.f32.xlu0 %v387
        %v389 = vpop.xlane.xlu0 %388
        %v390 = vadd.f32 %v340, %v341
        %391 = vadd.xlane.f32.xlu0 %v390
        %v392 = vpop.xlane.xlu0 %391
        %v393 = vadd.f32 %v342, %v343
        %394 = vadd.xlane.f32.xlu0 %v393
        %v395 = vpop.xlane.xlu0 %394
        %v396 = vadd.f32 %v344, %v345
        %397 = vadd.xlane.f32.xlu0 %v396
        %v398 = vpop.xlane.xlu0 %397
        %v399 = vadd.f32 %v346, %v347
        %400 = vadd.xlane.f32.xlu0 %v399
        %v401 = vpop.xlane.xlu0 %400
        %v402 = vadd.f32 %v348, %v349
        %403 = vadd.xlane.f32.xlu0 %v402
        %v404 = vpop.xlane.xlu0 %403
        %v405 = vadd.f32 %v350, %v351
        %406 = vadd.xlane.f32.xlu0 %v405
        %v407 = vpop.xlane.xlu0 %406
        %v408 = vadd.f32 %v352, %v353
        %409 = vadd.xlane.f32.xlu0 %v408
        %v410 = vpop.xlane.xlu0 %409
        %v411 = vadd.f32 %v354, %v355
        %412 = vadd.xlane.f32.xlu0 %v411
        %v413 = vpop.xlane.xlu0 %412
        %v414 = vadd.f32 %v356, %v357
        %415 = vadd.xlane.f32.xlu0 %v414
        %v416 = vpop.xlane.xlu0 %415
        %v417 = vadd.f32 %v358, %v359
        %418 = vadd.xlane.f32.xlu0 %v417
        %v419 = vpop.xlane.xlu0 %418
        %v420 = vadd.f32 %v360, %v361
        %421 = vadd.xlane.f32.xlu0 %v420
        %v422 = vpop.xlane.xlu0 %421
        %v423 = vadd.f32 %v362, %v363
        %424 = vadd.xlane.f32.xlu0 %v423
        %v425 = vpop.xlane.xlu0 %424
        %v426 = vadd.f32 %v364, %v365
        %427 = vadd.xlane.f32.xlu0 %v426
        %v428 = vpop.xlane.xlu0 %427
        %v429 = vmul.f32 %v263, 0.0051020407
        %v430 = vmul.f32 %v266, 0.0051020407
        %v431 = vmul.f32 %v269, 0.0051020407
        %v432 = vmul.f32 %v272, 0.0051020407
        %v433 = vmul.f32 %v275, 0.0051020407
        %v434 = vmul.f32 %v278, 0.0051020407
        %v435 = vmul.f32 %v281, 0.0051020407
        %v436 = vmul.f32 %v284, 0.0051020407
        %v437 = vmul.f32 %v287, 0.0051020407
        %v438 = vmul.f32 %v290, 0.0051020407
        %v439 = vmul.f32 %v293, 0.0051020407
        %v440 = vmul.f32 %v296, 0.0051020407
        %v441 = vmul.f32 %v299, 0.0051020407
        %v442 = vmul.f32 %v302, 0.0051020407
        %v443 = vmul.f32 %v305, 0.0051020407
        %v444 = vmul.f32 %v308, 0.0051020407
        %v445 = vmul.f32 %v311, 0.0051020407
        %v446 = vmul.f32 %v314, 0.0051020407
        %v447 = vmul.f32 %v317, 0.0051020407
        %v448 = vmul.f32 %v320, 0.0051020407
        %v449 = vmul.f32 %v323, 0.0051020407
        %v450 = vmul.f32 %v368, 0.0051020407
        %v451 = vmul.f32 %v371, 0.0051020407
        %v452 = vmul.f32 %v374, 0.0051020407
        %v453 = vmul.f32 %v377, 0.0051020407
        %v454 = vmul.f32 %v380, 0.0051020407
        %v455 = vmul.f32 %v383, 0.0051020407
        %v456 = vmul.f32 %v386, 0.0051020407
        %v457 = vmul.f32 %v389, 0.0051020407
        %v458 = vmul.f32 %v392, 0.0051020407
        %v459 = vmul.f32 %v395, 0.0051020407
        %v460 = vmul.f32 %v398, 0.0051020407
        %v461 = vmul.f32 %v401, 0.0051020407
        %v462 = vmul.f32 %v404, 0.0051020407
        %v463 = vmul.f32 %v407, 0.0051020407
        %v464 = vmul.f32 %v410, 0.0051020407
        %v465 = vmul.f32 %v413, 0.0051020407
        %v466 = vmul.f32 %v416, 0.0051020407
        %v467 = vmul.f32 %v419, 0.0051020407
        %v468 = vmul.f32 %v422, 0.0051020407
        %v469 = vmul.f32 %v425, 0.0051020407
        %v470 = vmul.f32 %v428, 0.0051020407
        %v471 = vmul.f32 %v429, %v429
        %v472 = vmul.f32 %v430, %v430
        %v473 = vmul.f32 %v431, %v431
        %v474 = vmul.f32 %v432, %v432
        %v475 = vmul.f32 %v433, %v433
        %v476 = vmul.f32 %v434, %v434
        %v477 = vmul.f32 %v435, %v435
        %v478 = vmul.f32 %v436, %v436
        %v479 = vmul.f32 %v437, %v437
        %v480 = vmul.f32 %v438, %v438
        %v481 = vmul.f32 %v439, %v439
        %v482 = vmul.f32 %v440, %v440
        %v483 = vmul.f32 %v441, %v441
        %v484 = vmul.f32 %v442, %v442
        %v485 = vmul.f32 %v443, %v443
        %v486 = vmul.f32 %v444, %v444
        %v487 = vmul.f32 %v445, %v445
        %v488 = vmul.f32 %v446, %v446
        %v489 = vmul.f32 %v447, %v447
        %v490 = vmul.f32 %v448, %v448
        %v491 = vmul.f32 %v449, %v449
        %v492 = vsub.f32 %v450, %v471
        %v493 = vsub.f32 %v451, %v472
        %v494 = vsub.f32 %v452, %v473
        %v495 = vsub.f32 %v453, %v474
        %v496 = vsub.f32 %v454, %v475
        %v497 = vsub.f32 %v455, %v476
        %v498 = vsub.f32 %v456, %v477
        %v499 = vsub.f32 %v457, %v478
        %v500 = vsub.f32 %v458, %v479
        %v501 = vsub.f32 %v459, %v480
        %v502 = vsub.f32 %v460, %v481
        %v503 = vsub.f32 %v461, %v482
        %v504 = vsub.f32 %v462, %v483
        %v505 = vsub.f32 %v463, %v484
        %v506 = vsub.f32 %v464, %v485
        %v507 = vsub.f32 %v465, %v486
        %v508 = vsub.f32 %v466, %v487
        %v509 = vsub.f32 %v467, %v488
        %v510 = vsub.f32 %v468, %v489
        %v511 = vsub.f32 %v469, %v490
        %v512 = vsub.f32 %v470, %v491
        %v513 = vmax.f32 %v492, 0.0
        %v514 = vmax.f32 %v493, 0.0
        %v515 = vmax.f32 %v494, 0.0
        %v516 = vmax.f32 %v495, 0.0
        %v517 = vmax.f32 %v496, 0.0
        %v518 = vmax.f32 %v497, 0.0
        %v519 = vmax.f32 %v498, 0.0
        %v520 = vmax.f32 %v499, 0.0
        %v521 = vmax.f32 %v500, 0.0
        %v522 = vmax.f32 %v501, 0.0
        %v523 = vmax.f32 %v502, 0.0
        %v524 = vmax.f32 %v503, 0.0
        %v525 = vmax.f32 %v504, 0.0
        %v526 = vmax.f32 %v505, 0.0
        %v527 = vmax.f32 %v506, 0.0
        %v528 = vmax.f32 %v507, 0.0
        %v529 = vmax.f32 %v508, 0.0
        %v530 = vmax.f32 %v509, 0.0
        %v531 = vmax.f32 %v510, 0.0
        %v532 = vmax.f32 %v511, 0.0
        %v533 = vmax.f32 %v512, 0.0
        %v534 = vadd.f32 %v513, 1e-05
        %v535 = vadd.f32 %v514, 1e-05
        %v536 = vadd.f32 %v515, 1e-05
        %v537 = vadd.f32 %v516, 1e-05
        %v538 = vadd.f32 %v517, 1e-05
        %v539 = vadd.f32 %v518, 1e-05
        %v540 = vadd.f32 %v519, 1e-05
        %v541 = vadd.f32 %v520, 1e-05
        %v542 = vadd.f32 %v521, 1e-05
        %v543 = vadd.f32 %v522, 1e-05
        %v544 = vadd.f32 %v523, 1e-05
        %v545 = vadd.f32 %v524, 1e-05
        %v546 = vadd.f32 %v525, 1e-05
        %v547 = vadd.f32 %v526, 1e-05
        %v548 = vadd.f32 %v527, 1e-05
        %v549 = vadd.f32 %v528, 1e-05
        %v550 = vadd.f32 %v529, 1e-05
        %v551 = vadd.f32 %v530, 1e-05
        %v552 = vadd.f32 %v531, 1e-05
        %v553 = vadd.f32 %v532, 1e-05
        %v554 = vadd.f32 %v533, 1e-05
        %v555 = vrsqrt.pop %v534
        %v556 = vmul.f32 %v555, %v534
        %v557 = vmul.f32 %v556, %v555
        %v558 = vmul.f32 0.5, %v557
        %v559 = vsub.f32 1.5, %v558
        %v560 = vmul.f32 %v555, %v559
        %vm561 = vweird.f32 %v534
        %vm562 = vweird.f32 %v555
        %vm563 = vmor %vm561, %vm562
        %v564 = vsel %vm563, %v555, %v560
        %v565 = vrsqrt.pop %v535
        %v566 = vmul.f32 %v565, %v535
        %v567 = vmul.f32 %v566, %v565
        %v568 = vmul.f32 0.5, %v567
        %v569 = vsub.f32 1.5, %v568
        %v570 = vmul.f32 %v565, %v569
        %vm571 = vweird.f32 %v535
        %vm572 = vweird.f32 %v565
        %vm573 = vmor %vm571, %vm572
        %v574 = vsel %vm573, %v565, %v570
        %v575 = vrsqrt.pop %v536
        %v576 = vmul.f32 %v575, %v536
        %v577 = vmul.f32 %v576, %v575
        %v578 = vmul.f32 0.5, %v577
        %v579 = vsub.f32 1.5, %v578
        %v580 = vmul.f32 %v575, %v579
        %vm581 = vweird.f32 %v536
        %vm582 = vweird.f32 %v575
        %vm583 = vmor %vm581, %vm582
        %v584 = vsel %vm583, %v575, %v580
        %v585 = vrsqrt.pop %v537
        %v586 = vmul.f32 %v585, %v537
        %v587 = vmul.f32 %v586, %v585
        %v588 = vmul.f32 0.5, %v587
        %v589 = vsub.f32 1.5, %v588
        %v590 = vmul.f32 %v585, %v589
        %vm591 = vweird.f32 %v537
        %vm592 = vweird.f32 %v585
        %vm593 = vmor %vm591, %vm592
        %v594 = vsel %vm593, %v585, %v590
        %v595 = vrsqrt.pop %v538
        %v596 = vmul.f32 %v595, %v538
        %v597 = vmul.f32 %v596, %v595
        %v598 = vmul.f32 0.5, %v597
        %v599 = vsub.f32 1.5, %v598
        %v600 = vmul.f32 %v595, %v599
        %vm601 = vweird.f32 %v538
        %vm602 = vweird.f32 %v595
        %vm603 = vmor %vm601, %vm602
        %v604 = vsel %vm603, %v595, %v600
        %v605 = vrsqrt.pop %v539
        %v606 = vmul.f32 %v605, %v539
        %v607 = vmul.f32 %v606, %v605
        %v608 = vmul.f32 0.5, %v607
        %v609 = vsub.f32 1.5, %v608
        %v610 = vmul.f32 %v605, %v609
        %vm611 = vweird.f32 %v539
        %vm612 = vweird.f32 %v605
        %vm613 = vmor %vm611, %vm612
        %v614 = vsel %vm613, %v605, %v610
        %v615 = vrsqrt.pop %v540
        %v616 = vmul.f32 %v615, %v540
        %v617 = vmul.f32 %v616, %v615
        %v618 = vmul.f32 0.5, %v617
        %v619 = vsub.f32 1.5, %v618
        %v620 = vmul.f32 %v615, %v619
        %vm621 = vweird.f32 %v540
        %vm622 = vweird.f32 %v615
        %vm623 = vmor %vm621, %vm622
        %v624 = vsel %vm623, %v615, %v620
        %v625 = vrsqrt.pop %v541
        %v626 = vmul.f32 %v625, %v541
        %v627 = vmul.f32 %v626, %v625
        %v628 = vmul.f32 0.5, %v627
        %v629 = vsub.f32 1.5, %v628
        %v630 = vmul.f32 %v625, %v629
        %vm631 = vweird.f32 %v541
        %vm632 = vweird.f32 %v625
        %vm633 = vmor %vm631, %vm632
        %v634 = vsel %vm633, %v625, %v630
        %v635 = vrsqrt.pop %v542
        %v636 = vmul.f32 %v635, %v542
        %v637 = vmul.f32 %v636, %v635
        %v638 = vmul.f32 0.5, %v637
        %v639 = vsub.f32 1.5, %v638
        %v640 = vmul.f32 %v635, %v639
        %vm641 = vweird.f32 %v542
        %vm642 = vweird.f32 %v635
        %vm643 = vmor %vm641, %vm642
        %v644 = vsel %vm643, %v635, %v640
        %v645 = vrsqrt.pop %v543
        %v646 = vmul.f32 %v645, %v543
        %v647 = vmul.f32 %v646, %v645
        %v648 = vmul.f32 0.5, %v647
        %v649 = vsub.f32 1.5, %v648
        %v650 = vmul.f32 %v645, %v649
        %vm651 = vweird.f32 %v543
        %vm652 = vweird.f32 %v645
        %vm653 = vmor %vm651, %vm652
        %v654 = vsel %vm653, %v645, %v650
        %v655 = vrsqrt.pop %v544
        %v656 = vmul.f32 %v655, %v544
        %v657 = vmul.f32 %v656, %v655
        %v658 = vmul.f32 0.5, %v657
        %v659 = vsub.f32 1.5, %v658
        %v660 = vmul.f32 %v655, %v659
        %vm661 = vweird.f32 %v544
        %vm662 = vweird.f32 %v655
        %vm663 = vmor %vm661, %vm662
        %v664 = vsel %vm663, %v655, %v660
        %v665 = vrsqrt.pop %v545
        %v666 = vmul.f32 %v665, %v545
        %v667 = vmul.f32 %v666, %v665
        %v668 = vmul.f32 0.5, %v667
        %v669 = vsub.f32 1.5, %v668
        %v670 = vmul.f32 %v665, %v669
        %vm671 = vweird.f32 %v545
        %vm672 = vweird.f32 %v665
        %vm673 = vmor %vm671, %vm672
        %v674 = vsel %vm673, %v665, %v670
        %v675 = vrsqrt.pop %v546
        %v676 = vmul.f32 %v675, %v546
        %v677 = vmul.f32 %v676, %v675
        %v678 = vmul.f32 0.5, %v677
        %v679 = vsub.f32 1.5, %v678
        %v680 = vmul.f32 %v675, %v679
        %vm681 = vweird.f32 %v546
        %vm682 = vweird.f32 %v675
        %vm683 = vmor %vm681, %vm682
        %v684 = vsel %vm683, %v675, %v680
        %v685 = vrsqrt.pop %v547
        %v686 = vmul.f32 %v685, %v547
        %v687 = vmul.f32 %v686, %v685
        %v688 = vmul.f32 0.5, %v687
        %v689 = vsub.f32 1.5, %v688
        %v690 = vmul.f32 %v685, %v689
        %vm691 = vweird.f32 %v547
        %vm692 = vweird.f32 %v685
        %vm693 = vmor %vm691, %vm692
        %v694 = vsel %vm693, %v685, %v690
        %v695 = vrsqrt.pop %v548
        %v696 = vmul.f32 %v695, %v548
        %v697 = vmul.f32 %v696, %v695
        %v698 = vmul.f32 0.5, %v697
        %v699 = vsub.f32 1.5, %v698
        %v700 = vmul.f32 %v695, %v699
        %vm701 = vweird.f32 %v548
        %vm702 = vweird.f32 %v695
        %vm703 = vmor %vm701, %vm702
        %v704 = vsel %vm703, %v695, %v700
        %v705 = vrsqrt.pop %v549
        %v706 = vmul.f32 %v705, %v549
        %v707 = vmul.f32 %v706, %v705
        %v708 = vmul.f32 0.5, %v707
        %v709 = vsub.f32 1.5, %v708
        %v710 = vmul.f32 %v705, %v709
        %vm711 = vweird.f32 %v549
        %vm712 = vweird.f32 %v705
        %vm713 = vmor %vm711, %vm712
        %v714 = vsel %vm713, %v705, %v710
        %v715 = vrsqrt.pop %v550
        %v716 = vmul.f32 %v715, %v550
        %v717 = vmul.f32 %v716, %v715
        %v718 = vmul.f32 0.5, %v717
        %v719 = vsub.f32 1.5, %v718
        %v720 = vmul.f32 %v715, %v719
        %vm721 = vweird.f32 %v550
        %vm722 = vweird.f32 %v715
        %vm723 = vmor %vm721, %vm722
        %v724 = vsel %vm723, %v715, %v720
        %v725 = vrsqrt.pop %v551
        %v726 = vmul.f32 %v725, %v551
        %v727 = vmul.f32 %v726, %v725
        %v728 = vmul.f32 0.5, %v727
        %v729 = vsub.f32 1.5, %v728
        %v730 = vmul.f32 %v725, %v729
        %vm731 = vweird.f32 %v551
        %vm732 = vweird.f32 %v725
        %vm733 = vmor %vm731, %vm732
        %v734 = vsel %vm733, %v725, %v730
        %v735 = vrsqrt.pop %v552
        %v736 = vmul.f32 %v735, %v552
        %v737 = vmul.f32 %v736, %v735
        %v738 = vmul.f32 0.5, %v737
        %v739 = vsub.f32 1.5, %v738
        %v740 = vmul.f32 %v735, %v739
        %vm741 = vweird.f32 %v552
        %vm742 = vweird.f32 %v735
        %vm743 = vmor %vm741, %vm742
        %v744 = vsel %vm743, %v735, %v740
        %v745 = vrsqrt.pop %v553
        %v746 = vmul.f32 %v745, %v553
        %v747 = vmul.f32 %v746, %v745
        %v748 = vmul.f32 0.5, %v747
        %v749 = vsub.f32 1.5, %v748
        %v750 = vmul.f32 %v745, %v749
        %vm751 = vweird.f32 %v553
        %vm752 = vweird.f32 %v745
        %vm753 = vmor %vm751, %vm752
        %v754 = vsel %vm753, %v745, %v750
        %v755 = vrsqrt.pop %v554
        %v756 = vmul.f32 %v755, %v554
        %v757 = vmul.f32 %v756, %v755
        %v758 = vmul.f32 0.5, %v757
        %v759 = vsub.f32 1.5, %v758
        %v760 = vmul.f32 %v755, %v759
        %vm761 = vweird.f32 %v554
        %vm762 = vweird.f32 %v755
        %vm763 = vmor %vm761, %vm762
        %v764 = vsel %vm763, %v755, %v760
        %v765 = vld [vmem:[%s210] sm:$0xff]
        %v766 = vld [vmem:[%s210 + $0x8] sm:$0xff]
        %v767 = vld [vmem:[%s210 + $0x10] sm:$0xff]
        %v768 = vld [vmem:[%s210 + $0x18] sm:$0xff]
        %v769 = vld [vmem:[%s210 + $0x20] sm:$0xff]
        %v770 = vld [vmem:[%s210 + $0x28] sm:$0xff]
        %v771 = vld [vmem:[%s210 + $0x30] sm:$0xff]
        %v772 = vld [vmem:[%s210 + $0x38] sm:$0xff]
        %v773 = vld [vmem:[%s210 + $0x40] sm:$0xff]
        %v774 = vld [vmem:[%s210 + $0x48] sm:$0xff]
        %v775 = vld [vmem:[%s210 + $0x50] sm:$0xff]
        %v776 = vld [vmem:[%s210 + $0x58] sm:$0xff]
        %v777 = vld [vmem:[%s210 + $0x60] sm:$0xff]
        %v778 = vld [vmem:[%s210 + $0x68] sm:$0xff]
        %v779 = vld [vmem:[%s210 + $0x70] sm:$0xff]
        %v780 = vld [vmem:[%s210 + $0x78] sm:$0xff]
        %v781 = vld [vmem:[%s210 + $0x80] sm:$0xff]
        %v782 = vld [vmem:[%s210 + $0x88] sm:$0xff]
        %v783 = vld [vmem:[%s210 + $0x90] sm:$0xff]
        %v784 = vld [vmem:[%s210 + $0x98] sm:$0xff]
        %v785 = vld [vmem:[%s210 + $0xa0] sm:$0xff]
        %v786 = vmul.f32 %v564, %v765
        %v787 = vmul.f32 %v574, %v766
        %v788 = vmul.f32 %v584, %v767
        %v789 = vmul.f32 %v594, %v768
        %v790 = vmul.f32 %v604, %v769
        %v791 = vmul.f32 %v614, %v770
        %v792 = vmul.f32 %v624, %v771
        %v793 = vmul.f32 %v634, %v772
        %v794 = vmul.f32 %v644, %v773
        %v795 = vmul.f32 %v654, %v774
        %v796 = vmul.f32 %v664, %v775
        %v797 = vmul.f32 %v674, %v776
        %v798 = vmul.f32 %v684, %v777
        %v799 = vmul.f32 %v694, %v778
        %v800 = vmul.f32 %v704, %v779
        %v801 = vmul.f32 %v714, %v780
        %v802 = vmul.f32 %v724, %v781
        %v803 = vmul.f32 %v734, %v782
        %v804 = vmul.f32 %v744, %v783
        %v805 = vmul.f32 %v754, %v784
        %v806 = vmul.f32 %v764, %v785
        %v807 = vld [vmem:[%s216] sm:$0xff]
        %v808 = vld [vmem:[%s216 + $0x8] sm:$0xff]
        %v809 = vld [vmem:[%s216 + $0x10] sm:$0xff]
        %v810 = vld [vmem:[%s216 + $0x18] sm:$0xff]
        %v811 = vld [vmem:[%s216 + $0x20] sm:$0xff]
        %v812 = vld [vmem:[%s216 + $0x28] sm:$0xff]
        %v813 = vld [vmem:[%s216 + $0x30] sm:$0xff]
        %v814 = vld [vmem:[%s216 + $0x38] sm:$0xff]
        %v815 = vld [vmem:[%s216 + $0x40] sm:$0xff]
        %v816 = vld [vmem:[%s216 + $0x48] sm:$0xff]
        %v817 = vld [vmem:[%s216 + $0x50] sm:$0xff]
        %v818 = vld [vmem:[%s216 + $0x58] sm:$0xff]
        %v819 = vld [vmem:[%s216 + $0x60] sm:$0xff]
        %v820 = vld [vmem:[%s216 + $0x68] sm:$0xff]
        %v821 = vld [vmem:[%s216 + $0x70] sm:$0xff]
        %v822 = vld [vmem:[%s216 + $0x78] sm:$0xff]
        %v823 = vld [vmem:[%s216 + $0x80] sm:$0xff]
        %v824 = vld [vmem:[%s216 + $0x88] sm:$0xff]
        %v825 = vld [vmem:[%s216 + $0x90] sm:$0xff]
        %v826 = vld [vmem:[%s216 + $0x98] sm:$0xff]
        %v827 = vld [vmem:[%s216 + $0xa0] sm:$0xff]
        %v828 = vmul.f32 %v429, %v786
        %v829 = vmul.f32 %v430, %v787
        %v830 = vmul.f32 %v431, %v788
        %v831 = vmul.f32 %v432, %v789
        %v832 = vmul.f32 %v433, %v790
        %v833 = vmul.f32 %v434, %v791
        %v834 = vmul.f32 %v435, %v792
        %v835 = vmul.f32 %v436, %v793
        %v836 = vmul.f32 %v437, %v794
        %v837 = vmul.f32 %v438, %v795
        %v838 = vmul.f32 %v439, %v796
        %v839 = vmul.f32 %v440, %v797
        %v840 = vmul.f32 %v441, %v798
        %v841 = vmul.f32 %v442, %v799
        %v842 = vmul.f32 %v443, %v800
        %v843 = vmul.f32 %v444, %v801
        %v844 = vmul.f32 %v445, %v802
        %v845 = vmul.f32 %v446, %v803
        %v846 = vmul.f32 %v447, %v804
        %v847 = vmul.f32 %v448, %v805
        %v848 = vmul.f32 %v449, %v806
        %v849 = vsub.f32 %v807, %v828
        %v850 = vsub.f32 %v808, %v829
        %v851 = vsub.f32 %v809, %v830
        %v852 = vsub.f32 %v810, %v831
        %v853 = vsub.f32 %v811, %v832
        %v854 = vsub.f32 %v812, %v833
        %v855 = vsub.f32 %v813, %v834
        %v856 = vsub.f32 %v814, %v835
        %v857 = vsub.f32 %v815, %v836
        %v858 = vsub.f32 %v816, %v837
        %v859 = vsub.f32 %v817, %v838
        %v860 = vsub.f32 %v818, %v839
        %v861 = vsub.f32 %v819, %v840
        %v862 = vsub.f32 %v820, %v841
        %v863 = vsub.f32 %v821, %v842
        %v864 = vsub.f32 %v822, %v843
        %v865 = vsub.f32 %v823, %v844
        %v866 = vsub.f32 %v824, %v845
        %v867 = vsub.f32 %v825, %v846
        %v868 = vsub.f32 %v826, %v847
        %v869 = vsub.f32 %v827, %v848
        %871 = vset.pattern.permute.xlu0 0
        %872 = vperm.xlu0 %871, %v786
        %v873 = vpop.permute.xlu0 %872
        %876 = vset.pattern.permute.xlu0 0
        %877 = vperm.xlu0 %876, %v787
        %v878 = vpop.permute.xlu0 %877
        %881 = vset.pattern.permute.xlu0 0
        %882 = vperm.xlu0 %881, %v788
        %v883 = vpop.permute.xlu0 %882
        %886 = vset.pattern.permute.xlu0 0
        %887 = vperm.xlu0 %886, %v789
        %v888 = vpop.permute.xlu0 %887
        %891 = vset.pattern.permute.xlu0 0
        %892 = vperm.xlu0 %891, %v790
        %v893 = vpop.permute.xlu0 %892
        %896 = vset.pattern.permute.xlu0 0
        %897 = vperm.xlu0 %896, %v791
        %v898 = vpop.permute.xlu0 %897
        %901 = vset.pattern.permute.xlu0 0
        %902 = vperm.xlu0 %901, %v792
        %v903 = vpop.permute.xlu0 %902
        %906 = vset.pattern.permute.xlu0 0
        %907 = vperm.xlu0 %906, %v793
        %v908 = vpop.permute.xlu0 %907
        %911 = vset.pattern.permute.xlu0 0
        %912 = vperm.xlu0 %911, %v794
        %v913 = vpop.permute.xlu0 %912
        %916 = vset.pattern.permute.xlu0 0
        %917 = vperm.xlu0 %916, %v795
        %v918 = vpop.permute.xlu0 %917
        %921 = vset.pattern.permute.xlu0 0
        %922 = vperm.xlu0 %921, %v796
        %v923 = vpop.permute.xlu0 %922
        %926 = vset.pattern.permute.xlu0 0
        %927 = vperm.xlu0 %926, %v797
        %v928 = vpop.permute.xlu0 %927
        %931 = vset.pattern.permute.xlu0 0
        %932 = vperm.xlu0 %931, %v798
        %v933 = vpop.permute.xlu0 %932
        %936 = vset.pattern.permute.xlu0 0
        %937 = vperm.xlu0 %936, %v799
        %v938 = vpop.permute.xlu0 %937
        %941 = vset.pattern.permute.xlu0 0
        %942 = vperm.xlu0 %941, %v800
        %v943 = vpop.permute.xlu0 %942
        %946 = vset.pattern.permute.xlu0 0
        %947 = vperm.xlu0 %946, %v801
        %v948 = vpop.permute.xlu0 %947
        %951 = vset.pattern.permute.xlu0 0
        %952 = vperm.xlu0 %951, %v802
        %v953 = vpop.permute.xlu0 %952
        %956 = vset.pattern.permute.xlu0 0
        %957 = vperm.xlu0 %956, %v803
        %v958 = vpop.permute.xlu0 %957
        %961 = vset.pattern.permute.xlu0 0
        %962 = vperm.xlu0 %961, %v804
        %v963 = vpop.permute.xlu0 %962
        %966 = vset.pattern.permute.xlu0 0
        %967 = vperm.xlu0 %966, %v805
        %v968 = vpop.permute.xlu0 %967
        %971 = vset.pattern.permute.xlu0 0
        %972 = vperm.xlu0 %971, %v806
        %v973 = vpop.permute.xlu0 %972
        %v975 = vmul.f32 %v219, %v873
        %v976 = vmul.f32 %v220, %v873
        %v977 = vmul.f32 %v221, %v878
        %v978 = vmul.f32 %v222, %v878
        %v979 = vmul.f32 %v223, %v883
        %v980 = vmul.f32 %v224, %v883
        %v981 = vmul.f32 %v225, %v888
        %v982 = vmul.f32 %v226, %v888
        %v983 = vmul.f32 %v227, %v893
        %v984 = vmul.f32 %v228, %v893
        %v985 = vmul.f32 %v229, %v898
        %v986 = vmul.f32 %v230, %v898
        %v987 = vmul.f32 %v231, %v903
        %v988 = vmul.f32 %v232, %v903
        %v989 = vmul.f32 %v233, %v908
        %v990 = vmul.f32 %v234, %v908
        %v991 = vmul.f32 %v235, %v913
        %v992 = vmul.f32 %v236, %v913
        %v993 = vmul.f32 %v237, %v918
        %v994 = vmul.f32 %v238, %v918
        %v995 = vmul.f32 %v239, %v923
        %v996 = vmul.f32 %v240, %v923
        %v997 = vmul.f32 %v241, %v928
        %v998 = vmul.f32 %v242, %v928
        %v999 = vmul.f32 %v243, %v933
        %v1000 = vmul.f32 %v244, %v933
        %v1001 = vmul.f32 %v245, %v938
        %v1002 = vmul.f32 %v246, %v938
        %v1003 = vmul.f32 %v247, %v943
        %v1004 = vmul.f32 %v248, %v943
        %v1005 = vmul.f32 %v249, %v948
        %v1006 = vmul.f32 %v250, %v948
        %v1007 = vmul.f32 %v251, %v953
        %v1008 = vmul.f32 %v252, %v953
        %v1009 = vmul.f32 %v253, %v958
        %v1010 = vmul.f32 %v254, %v958
        %v1011 = vmul.f32 %v255, %v963
        %v1012 = vmul.f32 %v256, %v963
        %v1013 = vmul.f32 %v257, %v968
        %v1014 = vmul.f32 %v258, %v968
        %v1015 = vmul.f32 %v259, %v973
        %v1016 = vmul.f32 %v260, %v973
        %1018 = vset.pattern.permute.xlu0 0
        %1019 = vperm.xlu0 %1018, %v849
        %v1020 = vpop.permute.xlu0 %1019
        %1023 = vset.pattern.permute.xlu0 0
        %1024 = vperm.xlu0 %1023, %v850
        %v1025 = vpop.permute.xlu0 %1024
        %1028 = vset.pattern.permute.xlu0 0
        %1029 = vperm.xlu0 %1028, %v851
        %v1030 = vpop.permute.xlu0 %1029
        %1033 = vset.pattern.permute.xlu0 0
        %1034 = vperm.xlu0 %1033, %v852
        %v1035 = vpop.permute.xlu0 %1034
        %1038 = vset.pattern.permute.xlu0 0
        %1039 = vperm.xlu0 %1038, %v853
        %v1040 = vpop.permute.xlu0 %1039
        %1043 = vset.pattern.permute.xlu0 0
        %1044 = vperm.xlu0 %1043, %v854
        %v1045 = vpop.permute.xlu0 %1044
        %1048 = vset.pattern.permute.xlu0 0
        %1049 = vperm.xlu0 %1048, %v855
        %v1050 = vpop.permute.xlu0 %1049
        %1053 = vset.pattern.permute.xlu0 0
        %1054 = vperm.xlu0 %1053, %v856
        %v1055 = vpop.permute.xlu0 %1054
        %1058 = vset.pattern.permute.xlu0 0
        %1059 = vperm.xlu0 %1058, %v857
        %v1060 = vpop.permute.xlu0 %1059
        %1063 = vset.pattern.permute.xlu0 0
        %1064 = vperm.xlu0 %1063, %v858
        %v1065 = vpop.permute.xlu0 %1064
        %1068 = vset.pattern.permute.xlu0 0
        %1069 = vperm.xlu0 %1068, %v859
        %v1070 = vpop.permute.xlu0 %1069
        %1073 = vset.pattern.permute.xlu0 0
        %1074 = vperm.xlu0 %1073, %v860
        %v1075 = vpop.permute.xlu0 %1074
        %1078 = vset.pattern.permute.xlu0 0
        %1079 = vperm.xlu0 %1078, %v861
        %v1080 = vpop.permute.xlu0 %1079
        %1083 = vset.pattern.permute.xlu0 0
        %1084 = vperm.xlu0 %1083, %v862
        %v1085 = vpop.permute.xlu0 %1084
        %1088 = vset.pattern.permute.xlu0 0
        %1089 = vperm.xlu0 %1088, %v863
        %v1090 = vpop.permute.xlu0 %1089
        %1093 = vset.pattern.permute.xlu0 0
        %1094 = vperm.xlu0 %1093, %v864
        %v1095 = vpop.permute.xlu0 %1094
        %1098 = vset.pattern.permute.xlu0 0
        %1099 = vperm.xlu0 %1098, %v865
        %v1100 = vpop.permute.xlu0 %1099
        %1103 = vset.pattern.permute.xlu0 0
        %1104 = vperm.xlu0 %1103, %v866
        %v1105 = vpop.permute.xlu0 %1104
        %1108 = vset.pattern.permute.xlu0 0
        %1109 = vperm.xlu0 %1108, %v867
        %v1110 = vpop.permute.xlu0 %1109
        %1113 = vset.pattern.permute.xlu0 0
        %1114 = vperm.xlu0 %1113, %v868
        %v1115 = vpop.permute.xlu0 %1114
        %1118 = vset.pattern.permute.xlu0 0
        %1119 = vperm.xlu0 %1118, %v869
        %v1120 = vpop.permute.xlu0 %1119
        %v1122 = vadd.f32 %v975, %v1020
        %v1123 = vadd.f32 %v976, %v1020
        %v1124 = vadd.f32 %v977, %v1025
        %v1125 = vadd.f32 %v978, %v1025
        %v1126 = vadd.f32 %v979, %v1030
        %v1127 = vadd.f32 %v980, %v1030
        %v1128 = vadd.f32 %v981, %v1035
        %v1129 = vadd.f32 %v982, %v1035
        %v1130 = vadd.f32 %v983, %v1040
        %v1131 = vadd.f32 %v984, %v1040
        %v1132 = vadd.f32 %v985, %v1045
        %v1133 = vadd.f32 %v986, %v1045
        %v1134 = vadd.f32 %v987, %v1050
        %v1135 = vadd.f32 %v988, %v1050
        %v1136 = vadd.f32 %v989, %v1055
        %v1137 = vadd.f32 %v990, %v1055
        %v1138 = vadd.f32 %v991, %v1060
        %v1139 = vadd.f32 %v992, %v1060
        %v1140 = vadd.f32 %v993, %v1065
        %v1141 = vadd.f32 %v994, %v1065
        %v1142 = vadd.f32 %v995, %v1070
        %v1143 = vadd.f32 %v996, %v1070
        %v1144 = vadd.f32 %v997, %v1075
        %v1145 = vadd.f32 %v998, %v1075
        %v1146 = vadd.f32 %v999, %v1080
        %v1147 = vadd.f32 %v1000, %v1080
        %v1148 = vadd.f32 %v1001, %v1085
        %v1149 = vadd.f32 %v1002, %v1085
        %v1150 = vadd.f32 %v1003, %v1090
        %v1151 = vadd.f32 %v1004, %v1090
        %v1152 = vadd.f32 %v1005, %v1095
        %v1153 = vadd.f32 %v1006, %v1095
        %v1154 = vadd.f32 %v1007, %v1100
        %v1155 = vadd.f32 %v1008, %v1100
        %v1156 = vadd.f32 %v1009, %v1105
        %v1157 = vadd.f32 %v1010, %v1105
        %v1158 = vadd.f32 %v1011, %v1110
        %v1159 = vadd.f32 %v1012, %v1110
        %v1160 = vadd.f32 %v1013, %v1115
        %v1161 = vadd.f32 %v1014, %v1115
        %v1162 = vadd.f32 %v1015, %v1120
        %v1163 = vadd.f32 %v1016, %v1120
        %1164 = vst [vmem:[%s198] sm:$0xff] %v1122
        %1165 = vst [vmem:[%s198 + $0x8] sm:$0xff] %v1123
        %1166 = vst [vmem:[%s198 + $0x10] sm:$0xff] %v1124
        %1167 = vst [vmem:[%s198 + $0x18] sm:$0xff] %v1125
        %1168 = vst [vmem:[%s198 + $0x20] sm:$0xff] %v1126
        %1169 = vst [vmem:[%s198 + $0x28] sm:$0xff] %v1127
        %1170 = vst [vmem:[%s198 + $0x30] sm:$0xff] %v1128
        %1171 = vst [vmem:[%s198 + $0x38] sm:$0xff] %v1129
        %1172 = vst [vmem:[%s198 + $0x40] sm:$0xff] %v1130
        %1173 = vst [vmem:[%s198 + $0x48] sm:$0xff] %v1131
        %1174 = vst [vmem:[%s198 + $0x50] sm:$0xff] %v1132
        %1175 = vst [vmem:[%s198 + $0x58] sm:$0xff] %v1133
        %1176 = vst [vmem:[%s198 + $0x60] sm:$0xff] %v1134
        %1177 = vst [vmem:[%s198 + $0x68] sm:$0xff] %v1135
        %1178 = vst [vmem:[%s198 + $0x70] sm:$0xff] %v1136
        %1179 = vst [vmem:[%s198 + $0x78] sm:$0xff] %v1137
        %1180 = vst [vmem:[%s198 + $0x80] sm:$0xff] %v1138
        %1181 = vst [vmem:[%s198 + $0x88] sm:$0xff] %v1139
        %1182 = vst [vmem:[%s198 + $0x90] sm:$0xff] %v1140
        %1183 = vst [vmem:[%s198 + $0x98] sm:$0xff] %v1141
        %1184 = vst [vmem:[%s198 + $0xa0] sm:$0xff] %v1142
        %1185 = vst [vmem:[%s198 + $0xa8] sm:$0xff] %v1143
        %1186 = vst [vmem:[%s198 + $0xb0] sm:$0xff] %v1144
        %1187 = vst [vmem:[%s198 + $0xb8] sm:$0xff] %v1145
        %1188 = vst [vmem:[%s198 + $0xc0] sm:$0xff] %v1146
        %1189 = vst [vmem:[%s198 + $0xc8] sm:$0xff] %v1147
        %1190 = vst [vmem:[%s198 + $0xd0] sm:$0xff] %v1148
        %1191 = vst [vmem:[%s198 + $0xd8] sm:$0xff] %v1149
        %1192 = vst [vmem:[%s198 + $0xe0] sm:$0xff] %v1150
        %1193 = vst [vmem:[%s198 + $0xe8] sm:$0xff] %v1151
        %1194 = vst [vmem:[%s198 + $0xf0] sm:$0xff] %v1152
        %1195 = vst [vmem:[%s198 + $0xf8] sm:$0xff] %v1153
        %1196 = vst [vmem:[%s198 + $0x100] sm:$0xff] %v1154
        %1197 = vst [vmem:[%s198 + $0x108] sm:$0xff] %v1155
        %1198 = vst [vmem:[%s198 + $0x110] sm:$0xff] %v1156
        %1199 = vst [vmem:[%s198 + $0x118] sm:$0xff] %v1157
        %1200 = vst [vmem:[%s198 + $0x120] sm:$0xff] %v1158
        %1201 = vst [vmem:[%s198 + $0x128] sm:$0xff] %v1159
        %1202 = vst [vmem:[%s198 + $0x130] sm:$0xff] %v1160
        %1203 = vst [vmem:[%s198 + $0x138] sm:$0xff] %v1161
        %1204 = vst [vmem:[%s198 + $0x140] sm:$0xff] %v1162
        %1205 = vst [vmem:[%s198 + $0x148] sm:$0xff] %v1163
        %s1206 = sand.u32 %s103, 1
        %s1207 = scalar_lea.sflag [#allocation3], %s1206
        %s1208 = sand.u32 %s103, 1
        %s1209 = smul.addr %s1208, 336
        %s1210 = scalar_lea.vmem [#allocation2], %s1209
        // Predicated region
        $region33: #{tpu_custom_call.1} parent=31 // pred_check
          %p1211 = pneg %p113
        $region34: #{tpu_custom_call.1} parent=31 // pred_check_branch
          %1213 = sbr.rel (%p1211) target = $region36
        $region35: #{tpu_custom_call.1} parent=31 // pred_region
          %s1214 = smul.u32 21, %s17
          %1216 = vsyncadd %s1207, 0
          %s1217 = smul.addr %s1214, 2
          %s1218 = smul.addr %s1217, 8
          %s1219 = scalar_lea.hbm %s3, %s1218
          %s1220 = sshll.u32 %s1210, 4
          %s1221 = int_to_ptr.vmem [resolvable:$true] %s1220
          %s1222 = sshll.u32 %s1219, 4
          %s1223 = int_to_ptr.hbm [resolvable:$true] %s1222
          %1228 = dma.vmem_to_hbm [thread:$0]  %s1221, 5376, %s1223, %s1207, 256, 256, 16
        $region36: #{tpu_custom_call.1} parent=31 // pred_fallthru
          _
      $region32: #{tpu_custom_call.1} parent=5 // pred_fallthru
        _
      %p1229 = scmp.le.s32.totalorder 2, %s12
      // Predicated region
      $region37: #{tpu_custom_call.1} parent=5 // pred_check
        %p1230 = pneg %p1229
      $region38: #{tpu_custom_call.1} parent=5 // pred_check_branch
        %1232 = sbr.rel (%p1230) target = $region40
      $region39: #{tpu_custom_call.1} parent=5 // pred_region
        %s1233 = ssub.s32 %s12, 2
        // Predicated region
        $region41: #{tpu_custom_call.1} parent=39 // pred_check
          %p1234 = pneg %p119
        $region42: #{tpu_custom_call.1} parent=39 // pred_check_branch
          %1236 = sbr.rel (%p1234) target = $region44
        $region43: #{tpu_custom_call.1} parent=39 // pred_region
          %s1237 = sand.u32 %s104, 1
          %s1238 = scalar_lea.sflag [#allocation3], %s1237
          %s1239 = sand.u32 %s104, 1
          %s1240 = smul.addr %s1239, 336
          %s1241 = scalar_lea.vmem [#allocation2], %s1240
          %1243 = dma.done %s1238, 5376
        $region44: #{tpu_custom_call.1} parent=39 // pred_fallthru
          _
      $region40: #{tpu_custom_call.1} parent=5 // pred_fallthru
        _
    $region6: #{tpu_custom_call.1} parent=1 // loop_footer
      %s16 = sadd.s32 1, %s12
    $region7: #{tpu_custom_call.1} parent=1 // loop_footer_branch
      %11 = sbr.rel target = $region3
    $region8: #{tpu_custom_call.1} parent=1 // loop_exit
      _
    %1244 = vsyncpa [#allocation3], 1
    %s1245 = scalar_lea.sflag [#allocation3], 1
    %1246 = vsyncpa %s1245, 1

</llo_original>
